<compile_context>
chip_gen: v7x
topology: tpu7x:2x2x1
jax: 0.10.0
libtpu: 0.0.40
codegen_flags: <defaults>
</compile_context>

<pallas_src>
import jax
import jax.numpy as jnp
from jax.experimental import pallas as pl
from jax.experimental.pallas import tpu as pltpu

# Total VMEM used by the pipelined blocks (output dbl-buffer + pred
# dbl-buffer).  12 MiB leaves headroom under v5e's 16 MiB scoped default.
_VMEM_BUDGET_BYTES = 12 << 20


def _onehot_kernel(pred_ref, out_ref):
    # pred_ref : (TB, 1)  int32   -- class index per row of this batch tile
    # out_ref  : (TB, TE) dtype   -- one-hot slab for columns [j*TE, (j+1)*TE)
    tile_e = out_ref.shape[1]
    col_off = pl.program_id(1) * tile_e
    col = jax.lax.broadcasted_iota(jnp.int32, out_ref.shape, 1)
    # Offset folded into the (TB, 1) operand: cheaper than adding it to the
    # full (TB, TE) iota.  Padded rows carry -1 and never match col >= 0.
    out_ref[...] = (col == (pred_ref[...] - col_off)).astype(out_ref.dtype)


def ne_label_embedding(prediction_id: jax.Array, encode_size: int,
                       *, tile_b: int | None = None,
                       tile_e: int | None = None,
                       out_dtype=jnp.float32) -> jax.Array:
    """Pallas equivalent of NELabelEmbedding.forward."""
    batch = prediction_id.shape[0]
    itemsize = jnp.dtype(out_dtype).itemsize
    # Sublane granularity for the output dtype (f32->8, bf16->16, int8->32).
    sub = max(8, (8 * 4) // itemsize)

    # --- encode axis: lane-dense, tile_e always divides e_pad ---------------
    e_pad = pl.cdiv(encode_size, 128) * 128
    if tile_e is None:
        n_e_tiles = pl.cdiv(e_pad, 2048)
        tile_e = 128 * pl.cdiv(e_pad // 128, n_e_tiles)
    else:
        tile_e = max(128, (tile_e // 128) * 128)
        tile_e = min(tile_e, e_pad)
    e_pad = pl.cdiv(e_pad, tile_e) * tile_e          # divisibility guarantee

    # --- batch axis: derive tile_b from the VMEM budget ---------------------
    if tile_b is None:
        # Per row of a batch tile: output block (x2 buffers) + pred block
        # (x2 buffers; the (TB, 1) int32 block pads to 128 lanes in VMEM).
        per_row = 2 * (tile_e * itemsize + 128 * 4)
        tile_b = _VMEM_BUDGET_BYTES // per_row
    tile_b = max(sub, (tile_b // sub) * sub)
    tile_b = min(tile_b, pl.cdiv(batch, sub) * sub)
    b_pad = pl.cdiv(batch, tile_b) * tile_b

    # --- v7x: keep both TensorCores busy when the grid would be (1, 1) ------
    if b_pad // tile_b == 1 and e_pad // tile_e == 1:
        if tile_b > sub:
            tile_b = max(sub, pl.cdiv(tile_b // 2, sub) * sub)
            b_pad = pl.cdiv(batch, tile_b) * tile_b
        elif tile_e > 128:
            tile_e = max(128, ((tile_e // 2) // 128) * 128)
            e_pad = pl.cdiv(e_pad, tile_e) * tile_e

    # --- pad inputs ----------------------------------------------------------
    pred = prediction_id.astype(jnp.int32).reshape(batch, 1)
    if b_pad != batch:
        # -1 never matches a non-negative column index -> padded rows are 0.
        pred = jnp.pad(pred, ((0, b_pad - batch), (0, 0)), constant_values=-1)

    grid = (b_pad // tile_b, e_pad // tile_e)

    cost = pl.CostEstimate(
        flops=b_pad * e_pad,              # one compare per output element
        transcendentals=0,
        bytes_accessed=b_pad * e_pad * itemsize + b_pad * 4,
    )

    out = pl.pallas_call(
        _onehot_kernel,
        out_shape=jax.ShapeDtypeStruct((b_pad, e_pad), out_dtype),
        grid=grid,
        # pred block index does not depend on j, so it is not re-DMA'd while
        # sweeping the encode_size axis.
        in_specs=[pl.BlockSpec((tile_b, 1), lambda i, j: (i, 0))],
        out_specs=pl.BlockSpec((tile_b, tile_e), lambda i, j: (i, j)),
        compiler_params=pltpu.CompilerParams(
            dimension_semantics=("parallel", "parallel")),
        cost_estimate=cost,
    )(pred)

    if b_pad != batch or e_pad != encode_size:
        out = out[:batch, :encode_size]
    return out


if __name__ == "__main__":
    key = jax.random.PRNGKey(0)

    # Case 1: aligned shapes matching the original demo.
    ENCODE_SIZE = 128
    BATCH = 8
    pred1 = jax.random.randint(key, (BATCH,), 0, ENCODE_SIZE, dtype=jnp.int32)
    out1 = jax.block_until_ready(ne_label_embedding(pred1, ENCODE_SIZE))
    ref1 = jax.nn.one_hot(pred1, ENCODE_SIZE, dtype=jnp.float32)
    assert out1.shape == (BATCH, ENCODE_SIZE)
    assert out1.dtype == jnp.float32
    assert bool(jnp.all(out1 == ref1))

    # Case 2: unaligned batch / encode_size (exercises padding, e-tile
    # divisibility fix, and the grid-(1,1) split path).
    ENCODE_SIZE2 = 200
    BATCH2 = 10
    pred2 = jax.random.randint(jax.random.PRNGKey(0), (BATCH2,), 0,
                               ENCODE_SIZE2, dtype=jnp.int32)
    out2 = jax.block_until_ready(ne_label_embedding(pred2, ENCODE_SIZE2))
    ref2 = jax.nn.one_hot(pred2, ENCODE_SIZE2, dtype=jnp.float32)
    assert out2.shape == (BATCH2, ENCODE_SIZE2)
    assert bool(jnp.all(out2 == ref2))

    print("KERNEL_OK")
</pallas_src>

<mosaic_0001>
module attributes {stable_mosaic.version = 11 : i64} {
  func.func @_onehot_kernel(%arg0: i32, %arg1: i32, %arg2: memref<8x1xi32, #tpu.memory_space<vmem>>, %arg3: memref<8x128xf32, #tpu.memory_space<vmem>>) attributes {dimension_semantics = [#tpu.dimension_semantics<parallel>, #tpu.dimension_semantics<parallel>], iteration_bounds = array<i64: 1, 1>, scalar_prefetch = 0 : i64, scratch_operands = 0 : i64, tpu.core_type = #tpu.core_type<tc>, window_params = [{transform_indices = @transform_0, window_bounds = array<i64: 8, 1>}, {transform_indices = @transform_1, window_bounds = array<i64: 8, 128>}]} {
    %c128_i32 = arith.constant 128 : i32
    %0 = arith.muli %arg1, %c128_i32 : i32
    %1 = tpu.iota {dimensions = array<i32: 1>} : vector<8x128xi32>
    %c0 = arith.constant 0 : index
    %c0_0 = arith.constant 0 : index
    %2 = vector.load %arg2[%c0, %c0_0] : memref<8x1xi32, #tpu.memory_space<vmem>>, vector<8x1xi32>
    %3 = vector.broadcast %0 : i32 to vector<8x1xi32>
    %4 = arith.subi %2, %3 : vector<8x1xi32>
    %5 = vector.broadcast %4 : vector<8x1xi32> to vector<8x128xi32>
    %6 = arith.cmpi eq, %1, %5 : vector<8x128xi32>
    %7 = arith.extui %6 : vector<8x128xi1> to vector<8x128xi32>
    %8 = arith.sitofp %7 : vector<8x128xi32> to vector<8x128xf32>
    %c0_1 = arith.constant 0 : index
    %c0_2 = arith.constant 0 : index
    %9 = vector.load %arg3[%c0_1, %c0_2] : memref<8x128xf32, #tpu.memory_space<vmem>>, vector<8x128xf32>
    tpu.vector_store %arg3[%c0_1, %c0_2], %8 {strides = array<i32>} : memref<8x128xf32, #tpu.memory_space<vmem>>, vector<8x128xf32>,
    return
  }
  func.func @transform_0(%arg0: i32, %arg1: i32) -> (i32, i32) {
    %c0_i32 = arith.constant 0 : i32
    %c0_i32_0 = arith.constant 0 : i32
    return %arg0, %c0_i32 : i32, i32
  }
  func.func @transform_1(%arg0: i32, %arg1: i32) -> (i32, i32) {
    %c0_i32 = arith.constant 0 : i32
    return %arg0, %arg1 : i32, i32
  }
}

</mosaic_0001>

<llo_original>
// kernel: tpu_custom_call.1
$region0: #{tpu_custom_call.1}
  #allocation0 [shape = 'u32[]', space=smem, size = 0x4, offset = 0x4, fixed_abs, tag = 'smem constant byte address 0x4 - core index']
  #allocation1 [shape = 'u32[144,128]{1,0:T(1,128)}', space=vmem, size = 0x12000, scoped, tag = 'internal scratch']
  %s0 = inlined_call_operand.vmem [shape: s32[8,1], index: 0, kind: input, shape index: {}]
  %s1 = inlined_call_operand.hbm [shape: f32[8,128], index: 1, kind: output, shape index: {}]
  %s2 = sld [smem:[#allocation0]]
  $region14: #{tpu_custom_call.1} parent=0
    _
  %s4 = ssub.s32 1, %s2
  %s5 = scalar_select 0, %s4, %s2
  $region1: #{tpu_custom_call.1} parent=0
    #allocation2 [shape = 'u8[4096]{0}', space=vmem, size = 0x1000, scoped, tag = 'output window, operand 0, single buffered']
    #allocation3 [shape = 's32[1]{0}', space=sflag, size = 0x4, scoped, tag = 'scoped memory for tpu_custom_call.1']
    %6 = vsyncpa [#allocation3], 0
    // Predicated region
    $region2: #{tpu_custom_call.1} parent=1 // pred_check
      _
    $region3: #{tpu_custom_call.1} parent=1 // pred_check_branch
      %8 = sbr.rel (0) target = $region5
    $region4: #{tpu_custom_call.1} parent=1 // pred_region
      _
    $region5: #{tpu_custom_call.1} parent=1 // pred_fallthru
      _
    %s9 = smul.u32 0, 128
    %v10 = vlaneseq
    %v11 = vand.u32 %v10, 127
    %v12 = vld [vmem:[%s0] sm:$0xff]
    %v13 = vstv %s9
    %v14 = vsub.s32 %v12, %v13
    %15 = vset.pattern.permute.xlu0 0
    %16 = vperm.xlu0 %15, %v14
    %v17 = vpop.permute.xlu0 %16
    %vm18 = vcmp.eq.s32.totalorder %v11, %v17
    %v19 = vsel %vm18, 1, 0
    %v20 = vcvt.s32.f32 %v19
    %21 = vst [vmem:[#allocation2] sm:$0xff] %v20
    // Predicated region
    $region6: #{tpu_custom_call.1} parent=1 // pred_check
      _
    $region7: #{tpu_custom_call.1} parent=1 // pred_check_branch
      %23 = sbr.rel (0) target = $region9
    $region8: #{tpu_custom_call.1} parent=1 // pred_region
      %s25 = ssub.s32 128, 128
      %26 = vsyncadd [#allocation3], %s25
      %s28 = sshll.u32 [#allocation2], 4
      %s29 = int_to_ptr.vmem [resolvable:$true] %s28
      %31 = dma.vmem_to_hbm [thread:$0]  %s29, 128, %s1, [#allocation3]
    $region9: #{tpu_custom_call.1} parent=1 // pred_fallthru
      _
    // Predicated region
    $region10: #{tpu_custom_call.1} parent=1 // pred_check
      _
    $region11: #{tpu_custom_call.1} parent=1 // pred_check_branch
      %33 = sbr.rel (0) target = $region13
    $region12: #{tpu_custom_call.1} parent=1 // pred_region
      %34 = dma.done [#allocation3], 128
    $region13: #{tpu_custom_call.1} parent=1 // pred_fallthru
      _
    %35 = vsyncpa [#allocation3], 1

</llo_original>
